<compile_context>
chip_gen: v7x
topology: tpu7x:2x2x1
jax: 0.10.0
libtpu: 0.0.40
codegen_flags: <defaults>
</compile_context>

<pallas_src>
import jax
import jax.numpy as jnp
from jax.experimental import pallas as pl
from jax.experimental.pallas import tpu as pltpu

LANE = 128
OUT_PAD = 8            # narrow (lane-masked) output width in HBM; sliced to C outside
DEFAULT_TILE_B = 8192  # rows per grid step; f32 x-tile = 4 MiB (double-buffered = 8 MiB)


def _round_up(x, m):
    return ((x + m - 1) // m) * m


def mlp_kernel(x_ref, w1_ref, b1_ref, w2_ref, b2_ref, o_ref):
    # Hidden layer: x @ W1 + b1, ReLU. MXU operands cast to bf16 (native MXU dtype),
    # accumulation stays f32; HBM traffic/layout is unchanged.
    x = x_ref[...].astype(jnp.bfloat16)
    w1 = w1_ref[...].astype(jnp.bfloat16)
    h = jnp.dot(x, w1, preferred_element_type=jnp.float32)
    h = jnp.maximum(h + b1_ref[...], 0.0)
    # Dropout(p=0.3): eval-mode forward is the identity (matches module.eval()).
    # TODO(synk): training-mode dropout (scaled Bernoulli mask via pltpu.prng_*) not wired up.
    out = jnp.dot(h.astype(jnp.bfloat16), w2_ref[...].astype(jnp.bfloat16),
                  preferred_element_type=jnp.float32)
    # Store only the first OUT_PAD (=8) lanes: the 128-lane-padded writeback was half of
    # all HBM traffic; the valid classes live in the first C columns.
    o_ref[...] = (out[:, :OUT_PAD] + b2_ref[...]).astype(o_ref.dtype)


def mlp_classifier(x, w1, b1, w2, b2, *, tile_b=DEFAULT_TILE_B):
    """x: [B, D_in]; w1: [D_in, H]; b1: [H]; w2: [H, C]; b2: [C] -> [B, C]."""
    B, D_in = x.shape
    H = w1.shape[1]
    C = w2.shape[1]
    assert C <= OUT_PAD
    dtype = x.dtype
    itemsize = jnp.dtype(dtype).itemsize

    # --- lane-dense padding of the params for the MXU only (H: 64 -> 128, C: 2 -> 128) ---
    H_pad = _round_up(H, LANE)
    C_mxu = LANE
    w1_p = jnp.zeros((D_in, H_pad), dtype).at[:, :H].set(w1)
    b1_p = jnp.zeros((1, H_pad), dtype).at[0, :H].set(b1)
    w2_p = jnp.zeros((H_pad, C_mxu), dtype).at[:H, :C].set(w2)
    b2_p = jnp.zeros((1, OUT_PAD), dtype).at[0, :C].set(b2)

    # --- batch tiling: no host-side padding of x (that costs an extra HBM pass).
    # The grid over-covers B; Pallas masks the boundary block's read/write DMAs. ---
    tile_b = max(8, _round_up(int(tile_b), 8))      # tile rows always 8-aligned
    if B >= 16:
        # >= 2 grid steps whenever possible so ("parallel",) can feed both v7x TCs.
        tb = min(tile_b, _round_up((B + 1) // 2, 8))
    else:
        tb = B   # single full-extent tile: block dims == array dims, always legal
    grid = (pl.cdiv(B, tb),)

    cost = pl.CostEstimate(
        flops=2 * B * (D_in * H_pad + H_pad * C_mxu),
        transcendentals=0,
        bytes_accessed=(
            B * (D_in + OUT_PAD)                       # x read + narrow out write
            + D_in * H_pad + H_pad * C_mxu             # weights
            + H_pad + OUT_PAD                          # biases
        ) * itemsize,
    )

    out_padded = pl.pallas_call(
        mlp_kernel,
        out_shape=jax.ShapeDtypeStruct((B, OUT_PAD), dtype),
        grid=grid,
        in_specs=[
            pl.BlockSpec((tb, D_in), lambda i: (i, 0)),      # streamed batch tiles
            pl.BlockSpec((D_in, H_pad), lambda i: (0, 0)),   # weights resident in VMEM
            pl.BlockSpec((1, H_pad), lambda i: (0, 0)),
            pl.BlockSpec((H_pad, C_mxu), lambda i: (0, 0)),
            pl.BlockSpec((1, OUT_PAD), lambda i: (0, 0)),
        ],
        out_specs=pl.BlockSpec((tb, OUT_PAD), lambda i: (i, 0)),
        compiler_params=pltpu.CompilerParams(
            dimension_semantics=("parallel",),
            vmem_limit_bytes=48 * 1024 * 1024,
        ),
        cost_estimate=cost,
    )(x, w1_p, b1_p, w2_p, b2_p)

    # Strip the (8 -> C) class padding outside the kernel (tiny: 32 B/row).
    return out_padded[:, :C]


def init_params(key, input_dim=128, hidden=64, num_classes=2, dtype=jnp.float32):
    # Deterministic init mimicking PyTorch nn.Linear default: U(-1/sqrt(fan_in), 1/sqrt(fan_in)).
    k1, k2, k3, k4 = jax.random.split(key, 4)
    bound1 = 1.0 / jnp.sqrt(input_dim)
    bound2 = 1.0 / jnp.sqrt(hidden)
    # Stored already transposed to [in, out] for the kernel.
    w1 = jax.random.uniform(k1, (input_dim, hidden), dtype, -bound1, bound1)
    b1 = jax.random.uniform(k2, (hidden,), dtype, -bound1, bound1)
    w2 = jax.random.uniform(k3, (hidden, num_classes), dtype, -bound2, bound2)
    b2 = jax.random.uniform(k4, (num_classes,), dtype, -bound2, bound2)
    return w1, b1, w2, b2


if __name__ == "__main__":
    key = jax.random.PRNGKey(0)
    kx, kp = jax.random.split(key)

    B, D_in, H, C = 2, 128, 64, 2
    x = jax.random.normal(kx, (B, D_in), jnp.float32)
    w1, b1, w2, b2 = init_params(kp, D_in, H, C)

    out = mlp_classifier(x, w1, b1, w2, b2)
    out = jax.block_until_ready(out)

    # Reference in plain JAX (eval-mode dropout == identity). bf16 MXU operands ->
    # relaxed tolerances vs the f32 reference.
    ref = jnp.maximum(x @ w1 + b1, 0.0) @ w2 + b2
    assert out.shape == (B, C)
    assert jnp.allclose(out, ref, atol=3e-2, rtol=2e-2)

    # Exercise the multi-step grid with a masked boundary tile (no host-side x padding).
    B2 = 2500
    x2 = jax.random.normal(kx, (B2, D_in), jnp.float32)
    out2 = jax.block_until_ready(mlp_classifier(x2, w1, b1, w2, b2, tile_b=1024))
    ref2 = jnp.maximum(x2 @ w1 + b1, 0.0) @ w2 + b2
    assert out2.shape == (B2, C)
    assert jnp.allclose(out2, ref2, atol=3e-2, rtol=2e-2)

    print("KERNEL_OK")
</pallas_src>

<mosaic_0001>
module attributes {stable_mosaic.version = 11 : i64} {
  func.func @mlp_kernel(%arg0: i32, %arg1: memref<2x128xf32, #tpu.memory_space<vmem>>, %arg2: memref<128x128xf32, #tpu.memory_space<vmem>>, %arg3: memref<1x128xf32, #tpu.memory_space<vmem>>, %arg4: memref<128x128xf32, #tpu.memory_space<vmem>>, %arg5: memref<1x8xf32, #tpu.memory_space<vmem>>, %arg6: memref<2x8xf32, #tpu.memory_space<vmem>>) attributes {dimension_semantics = [#tpu.dimension_semantics<parallel>], iteration_bounds = array<i64: 1>, scalar_prefetch = 0 : i64, scratch_operands = 0 : i64, tpu.core_type = #tpu.core_type<tc>, window_params = [{transform_indices = @transform_0, window_bounds = array<i64: 2, 128>}, {pipeline_mode = #tpu.pipeline_mode<synchronous>, transform_indices = @transform_1, window_bounds = array<i64: 128, 128>}, {pipeline_mode = #tpu.pipeline_mode<synchronous>, transform_indices = @transform_2, window_bounds = array<i64: 1, 128>}, {pipeline_mode = #tpu.pipeline_mode<synchronous>, transform_indices = @transform_3, window_bounds = array<i64: 128, 128>}, {pipeline_mode = #tpu.pipeline_mode<synchronous>, transform_indices = @transform_4, window_bounds = array<i64: 1, 8>}, {transform_indices = @transform_5, window_bounds = array<i64: 2, 8>}]} {
    %c0 = arith.constant 0 : index
    %c0_0 = arith.constant 0 : index
    %0 = vector.load %arg1[%c0, %c0_0] : memref<2x128xf32, #tpu.memory_space<vmem>>, vector<2x128xf32>
    %1 = arith.truncf %0 : vector<2x128xf32> to vector<2x128xbf16>
    %c0_1 = arith.constant 0 : index
    %c0_2 = arith.constant 0 : index
    %2 = vector.load %arg2[%c0_1, %c0_2] : memref<128x128xf32, #tpu.memory_space<vmem>>, vector<128x128xf32>
    %3 = arith.truncf %2 : vector<128x128xf32> to vector<128x128xbf16>
    %cst = arith.constant dense<0.000000e+00> : vector<2x128xf32>
    %4 = tpu.matmul %1, %3, %cst {dimension_numbers = #tpu.dot_dimension_numbers<[1], [0], [0], [1], [0, 0, 1, 1], [], []>} : vector<2x128xbf16>, vector<128x128xbf16>, vector<2x128xf32> -> vector<2x128xf32>
    %c0_3 = arith.constant 0 : index
    %c0_4 = arith.constant 0 : index
    %5 = vector.load %arg3[%c0_3, %c0_4] : memref<1x128xf32, #tpu.memory_space<vmem>>, vector<1x128xf32>
    %6 = vector.broadcast %5 : vector<1x128xf32> to vector<2x128xf32>
    %7 = arith.addf %4, %6 : vector<2x128xf32>
    %cst_5 = arith.constant 0.000000e+00 : f32
    %8 = vector.broadcast %cst_5 : f32 to vector<2x128xf32>
    %9 = arith.maximumf %7, %8 : vector<2x128xf32>
    %10 = arith.truncf %9 : vector<2x128xf32> to vector<2x128xbf16>
    %c0_6 = arith.constant 0 : index
    %c0_7 = arith.constant 0 : index
    %11 = vector.load %arg4[%c0_6, %c0_7] : memref<128x128xf32, #tpu.memory_space<vmem>>, vector<128x128xf32>
    %12 = arith.truncf %11 : vector<128x128xf32> to vector<128x128xbf16>
    %cst_8 = arith.constant dense<0.000000e+00> : vector<2x128xf32>
    %13 = tpu.matmul %10, %12, %cst_8 {dimension_numbers = #tpu.dot_dimension_numbers<[1], [0], [0], [1], [0, 0, 1, 1], [], []>} : vector<2x128xbf16>, vector<128x128xbf16>, vector<2x128xf32> -> vector<2x128xf32>
    %14 = vector.extract_strided_slice %13 {offsets = [0, 0], sizes = [2, 8], strides = [1, 1]} : vector<2x128xf32> to vector<2x8xf32>
    %c0_9 = arith.constant 0 : index
    %c0_10 = arith.constant 0 : index
    %15 = vector.load %arg5[%c0_9, %c0_10] : memref<1x8xf32, #tpu.memory_space<vmem>>, vector<1x8xf32>
    %16 = vector.broadcast %15 : vector<1x8xf32> to vector<2x8xf32>
    %17 = arith.addf %14, %16 : vector<2x8xf32>
    %c0_11 = arith.constant 0 : index
    %c0_12 = arith.constant 0 : index
    %18 = vector.load %arg6[%c0_11, %c0_12] : memref<2x8xf32, #tpu.memory_space<vmem>>, vector<2x8xf32>
    tpu.vector_store %arg6[%c0_11, %c0_12], %17 {strides = array<i32>} : memref<2x8xf32, #tpu.memory_space<vmem>>, vector<2x8xf32>,
    return
  }
  func.func @transform_0(%arg0: i32) -> (i32, i32) {
    %c0_i32 = arith.constant 0 : i32
    %c0_i32_0 = arith.constant 0 : i32
    return %arg0, %c0_i32 : i32, i32
  }
  func.func @transform_1(%arg0: i32) -> (i32, i32) {
    %c0_i32 = arith.constant 0 : i32
    %c0_i32_0 = arith.constant 0 : i32
    %c0_i32_1 = arith.constant 0 : i32
    return %c0_i32, %c0_i32_0 : i32, i32
  }
  func.func @transform_2(%arg0: i32) -> (i32, i32) {
    %c0_i32 = arith.constant 0 : i32
    %c0_i32_0 = arith.constant 0 : i32
    %c0_i32_1 = arith.constant 0 : i32
    return %c0_i32, %c0_i32_0 : i32, i32
  }
  func.func @transform_3(%arg0: i32) -> (i32, i32) {
    %c0_i32 = arith.constant 0 : i32
    %c0_i32_0 = arith.constant 0 : i32
    %c0_i32_1 = arith.constant 0 : i32
    return %c0_i32, %c0_i32_0 : i32, i32
  }
  func.func @transform_4(%arg0: i32) -> (i32, i32) {
    %c0_i32 = arith.constant 0 : i32
    %c0_i32_0 = arith.constant 0 : i32
    %c0_i32_1 = arith.constant 0 : i32
    return %c0_i32, %c0_i32_0 : i32, i32
  }
  func.func @transform_5(%arg0: i32) -> (i32, i32) {
    %c0_i32 = arith.constant 0 : i32
    %c0_i32_0 = arith.constant 0 : i32
    return %arg0, %c0_i32 : i32, i32
  }
}

</mosaic_0001>

<llo_original>
// kernel: tpu_custom_call.1
$region0: #{tpu_custom_call.1}
  #allocation0 [shape = 'u32[]', space=smem, size = 0x4, offset = 0x4, fixed_abs, tag = 'smem constant byte address 0x4 - core index']
  #allocation1 [shape = 'u32[144,128]{1,0:T(1,128)}', space=vmem, size = 0x12000, scoped, tag = 'internal scratch']
  %s0 = inlined_call_operand.hbm [shape: f32[2,128], index: 0, kind: input, shape index: {}]
  %s1 = inlined_call_operand.hbm [shape: f32[128,128], index: 1, kind: input, shape index: {}]
  %s2 = inlined_call_operand.vmem [shape: f32[1,128], index: 2, kind: input, shape index: {}]
  %s3 = inlined_call_operand.hbm [shape: f32[128,128], index: 3, kind: input, shape index: {}]
  %s4 = inlined_call_operand.vmem [shape: f32[1,8], index: 4, kind: input, shape index: {}]
  %s5 = inlined_call_operand.hbm [shape: f32[2,8], index: 5, kind: output, shape index: {}]
  %s6 = sld [smem:[#allocation0]]
  $region42: #{tpu_custom_call.1} parent=0
    _
  %s8 = ssub.s32 1, %s6
  %s9 = scalar_select 0, %s8, %s6
  $region1: #{tpu_custom_call.1} parent=0
    #allocation2 [shape = 'u8[1024]{0}', space=vmem, size = 0x400, scoped, tag = 'input window, operand 0, single buffered']
    #allocation3 [shape = 's32[1]{0}', space=sflag, size = 0x4, scoped, tag = 'scoped memory for tpu_custom_call.1']
    #allocation4 [shape = 's32[1]{0}', space=sflag, size = 0x4, scoped, tag = 'scoped memory for tpu_custom_call.1']
    #allocation5 [shape = 'u8[65536]{0}', space=vmem, size = 0x10000, scoped, tag = 'input window, operand 1, single buffered']
    #allocation6 [shape = 's32[1]{0}', space=sflag, size = 0x4, scoped, tag = 'scoped memory for tpu_custom_call.1']
    #allocation7 [shape = 'u8[65536]{0}', space=vmem, size = 0x10000, scoped, tag = 'input window, operand 3, single buffered']
    #allocation8 [shape = 'u8[1024]{0}', space=vmem, size = 0x400, scoped, tag = 'output window, operand 0, single buffered']
    %10 = vsyncpa [#allocation3], 0
    %11 = vsyncpa [#allocation6], 0
    %12 = vsyncpa [#allocation4], 0
    // Predicated region
    $region2: #{tpu_custom_call.1} parent=1 // pred_check
      _
    $region3: #{tpu_custom_call.1} parent=1 // pred_check_branch
      %14 = sbr.rel (0) target = $region5
    $region4: #{tpu_custom_call.1} parent=1 // pred_region
      %s16 = ssub.s32 32, 32
      %17 = vsyncadd [#allocation3], %s16
      %s19 = sshll.u32 [#allocation2], 4
      %s20 = int_to_ptr.vmem [resolvable:$true] %s19
      %22 = dma.hbm_to_vmem [thread:$0]  %s0, 32, %s20, [#allocation3]
    $region5: #{tpu_custom_call.1} parent=1 // pred_fallthru
      _
    // Predicated region
    $region6: #{tpu_custom_call.1} parent=1 // pred_check
      _
    $region7: #{tpu_custom_call.1} parent=1 // pred_check_branch
      %24 = sbr.rel (0) target = $region9
    $region8: #{tpu_custom_call.1} parent=1 // pred_region
      %s26 = ssub.s32 2048, 2048
      %27 = vsyncadd [#allocation6], %s26
      %s28 = sshll.u32 [#allocation5], 4
      %s29 = int_to_ptr.vmem [resolvable:$true] %s28
      %34 = dma.hbm_to_vmem [thread:$0]  %s1, 2048, %s29, [#allocation6], 128, 128, 8
    $region9: #{tpu_custom_call.1} parent=1 // pred_fallthru
      _
    // Predicated region
    $region10: #{tpu_custom_call.1} parent=1 // pred_check
      _
    $region11: #{tpu_custom_call.1} parent=1 // pred_check_branch
      %36 = sbr.rel (0) target = $region13
    $region12: #{tpu_custom_call.1} parent=1 // pred_region
      _
    $region13: #{tpu_custom_call.1} parent=1 // pred_fallthru
      _
    // Predicated region
    $region14: #{tpu_custom_call.1} parent=1 // pred_check
      _
    $region15: #{tpu_custom_call.1} parent=1 // pred_check_branch
      %38 = sbr.rel (0) target = $region17
    $region16: #{tpu_custom_call.1} parent=1 // pred_region
      %s40 = ssub.s32 2048, 2048
      %41 = vsyncadd [#allocation6], %s40
      %s42 = sshll.u32 [#allocation7], 4
      %s43 = int_to_ptr.vmem [resolvable:$true] %s42
      %48 = dma.hbm_to_vmem [thread:$0]  %s3, 2048, %s43, [#allocation6], 128, 128, 8
    $region17: #{tpu_custom_call.1} parent=1 // pred_fallthru
      _
    // Predicated region
    $region18: #{tpu_custom_call.1} parent=1 // pred_check
      _
    $region19: #{tpu_custom_call.1} parent=1 // pred_check_branch
      %50 = sbr.rel (0) target = $region21
    $region20: #{tpu_custom_call.1} parent=1 // pred_region
      _
    $region21: #{tpu_custom_call.1} parent=1 // pred_fallthru
      _
    // Predicated region
    $region22: #{tpu_custom_call.1} parent=1 // pred_check
      _
    $region23: #{tpu_custom_call.1} parent=1 // pred_check_branch
      %52 = sbr.rel (0) target = $region25
    $region24: #{tpu_custom_call.1} parent=1 // pred_region
      %53 = dma.done [#allocation3], 32
    $region25: #{tpu_custom_call.1} parent=1 // pred_fallthru
      _
    // Predicated region
    $region26: #{tpu_custom_call.1} parent=1 // pred_check
      _
    $region27: #{tpu_custom_call.1} parent=1 // pred_check_branch
      %55 = sbr.rel (0) target = $region29
    $region28: #{tpu_custom_call.1} parent=1 // pred_region
      %56 = dma.done [#allocation6], 2048
    $region29: #{tpu_custom_call.1} parent=1 // pred_fallthru
      _
    // Predicated region
    $region30: #{tpu_custom_call.1} parent=1 // pred_check
      _
    $region31: #{tpu_custom_call.1} parent=1 // pred_check_branch
      %58 = sbr.rel (0) target = $region33
    $region32: #{tpu_custom_call.1} parent=1 // pred_region
      %59 = dma.done [#allocation6], 2048
    $region33: #{tpu_custom_call.1} parent=1 // pred_fallthru
      _
    %v61 = vld [vmem:[#allocation2] sm:$0x3]
    %v62 = vpack.c.bf16 %v61, %v61
    %v63 = vld [vmem:[#allocation5] sm:$0xff]
    %v64 = vld [vmem:[#allocation5 + $0x8] sm:$0xff]
    %v65 = vld [vmem:[#allocation5 + $0x10] sm:$0xff]
    %v66 = vld [vmem:[#allocation5 + $0x18] sm:$0xff]
    %v67 = vld [vmem:[#allocation5 + $0x20] sm:$0xff]
    %v68 = vld [vmem:[#allocation5 + $0x28] sm:$0xff]
    %v69 = vld [vmem:[#allocation5 + $0x30] sm:$0xff]
    %v70 = vld [vmem:[#allocation5 + $0x38] sm:$0xff]
    %v71 = vld [vmem:[#allocation5 + $0x40] sm:$0xff]
    %v72 = vld [vmem:[#allocation5 + $0x48] sm:$0xff]
    %v73 = vld [vmem:[#allocation5 + $0x50] sm:$0xff]
    %v74 = vld [vmem:[#allocation5 + $0x58] sm:$0xff]
    %v75 = vld [vmem:[#allocation5 + $0x60] sm:$0xff]
    %v76 = vld [vmem:[#allocation5 + $0x68] sm:$0xff]
    %v77 = vld [vmem:[#allocation5 + $0x70] sm:$0xff]
    %v78 = vld [vmem:[#allocation5 + $0x78] sm:$0xff]
    %v79 = vpack.c.bf16 %v64, %v63
    %v80 = vpack.c.bf16 %v66, %v65
    %v81 = vpack.c.bf16 %v68, %v67
    %v82 = vpack.c.bf16 %v70, %v69
    %v83 = vpack.c.bf16 %v72, %v71
    %v84 = vpack.c.bf16 %v74, %v73
    %v85 = vpack.c.bf16 %v76, %v75
    %v86 = vpack.c.bf16 %v78, %v77
    %v87 = vld [vmem:[%s2] sm:$0x1]
    %v89 = vlaneseq
    %v90 = vshrl.u32 %v89, 7
    %v91 = vsub.s32 0, %v90
    %v92 = vrot.slane %v87, %v91
    %94 = vmatprep.subr.bf16.mxu0 0
    %95 = vmatpush1.bf16.msra.mxu0 %v79
    %96 = vmatprep.subr.bf16.mxu0 0
    %97 = vmatpush1.bf16.msra.mxu0 %v80
    %98 = vmatprep.subr.bf16.mxu0 0
    %99 = vmatpush1.bf16.msra.mxu0 %v81
    %100 = vmatprep.subr.bf16.mxu0 0
    %101 = vmatpush1.bf16.msra.mxu0 %v82
    %102 = vmatprep.subr.bf16.mxu0 0
    %103 = vmatpush1.bf16.msra.mxu0 %v83
    %104 = vmatprep.subr.bf16.mxu0 0
    %105 = vmatpush1.bf16.msra.mxu0 %v84
    %106 = vmatprep.subr.bf16.mxu0 0
    %107 = vmatpush1.bf16.msra.mxu0 %v85
    %108 = vmatprep.subr.bf16.mxu0 0
    %109 = vmatpush1.bf16.msra.mxu0 %v86
    %110 = vmatprep.subr.bf16.mxu0 0
    %111 = vmatpush1.bf16.msra.mxu0 0
    %112 = vmatprep.subr.bf16.mxu0 0
    %113 = vmatpush1.bf16.msra.mxu0 0
    %114 = vmatprep.subr.bf16.mxu0 0
    %115 = vmatpush1.bf16.msra.mxu0 0
    %116 = vmatprep.subr.bf16.mxu0 0
    %117 = vmatpush1.bf16.msra.mxu0 0
    %118 = vmatprep.subr.bf16.mxu0 0
    %119 = vmatpush1.bf16.msra.mxu0 0
    %120 = vmatprep.subr.bf16.mxu0 0
    %121 = vmatpush1.bf16.msra.mxu0 0
    %122 = vmatprep.subr.bf16.mxu0 0
    %123 = vmatpush1.bf16.msra.mxu0 0
    %124 = vmatprep.subr.bf16.mxu0 0
    %125 = vmatpush1.bf16.msra.mxu0 0
    %126 = vmatprep.mubr.bf16.mxu0 0
    %127 = vmatmul.mubr.bf16.gmra.mrb[0].mxu0 %v62
    %v128 = vpop.f32.mrb[0].mxu0
    %v129 = vadd.f32 %v92, %v128
    %v130 = vpop.f32.mrb[0].mxu0
    %v131 = vpop.f32.mrb[0].mxu0
    %v132 = vpop.f32.mrb[0].mxu0
    %133 = vdwg.mxu0
    %v134 = vmax.f32 %v129, 0.0
    %v135 = vpack.c.bf16 %v134, %v134
    %v136 = vld [vmem:[#allocation7] sm:$0xff]
    %v137 = vld [vmem:[#allocation7 + $0x8] sm:$0xff]
    %v138 = vld [vmem:[#allocation7 + $0x10] sm:$0xff]
    %v139 = vld [vmem:[#allocation7 + $0x18] sm:$0xff]
    %v140 = vld [vmem:[#allocation7 + $0x20] sm:$0xff]
    %v141 = vld [vmem:[#allocation7 + $0x28] sm:$0xff]
    %v142 = vld [vmem:[#allocation7 + $0x30] sm:$0xff]
    %v143 = vld [vmem:[#allocation7 + $0x38] sm:$0xff]
    %v144 = vld [vmem:[#allocation7 + $0x40] sm:$0xff]
    %v145 = vld [vmem:[#allocation7 + $0x48] sm:$0xff]
    %v146 = vld [vmem:[#allocation7 + $0x50] sm:$0xff]
    %v147 = vld [vmem:[#allocation7 + $0x58] sm:$0xff]
    %v148 = vld [vmem:[#allocation7 + $0x60] sm:$0xff]
    %v149 = vld [vmem:[#allocation7 + $0x68] sm:$0xff]
    %v150 = vld [vmem:[#allocation7 + $0x70] sm:$0xff]
    %v151 = vld [vmem:[#allocation7 + $0x78] sm:$0xff]
    %v152 = vpack.c.bf16 %v137, %v136
    %v153 = vpack.c.bf16 %v139, %v138
    %v154 = vpack.c.bf16 %v141, %v140
    %v155 = vpack.c.bf16 %v143, %v142
    %v156 = vpack.c.bf16 %v145, %v144
    %v157 = vpack.c.bf16 %v147, %v146
    %v158 = vpack.c.bf16 %v149, %v148
    %v159 = vpack.c.bf16 %v151, %v150
    %160 = vmatprep.subr.bf16.mxu0 0
    %161 = vmatpush1.bf16.msra.mxu0 %v152
    %162 = vmatprep.subr.bf16.mxu0 0
    %163 = vmatpush1.bf16.msra.mxu0 %v153
    %164 = vmatprep.subr.bf16.mxu0 0
    %165 = vmatpush1.bf16.msra.mxu0 %v154
    %166 = vmatprep.subr.bf16.mxu0 0
    %167 = vmatpush1.bf16.msra.mxu0 %v155
    %168 = vmatprep.subr.bf16.mxu0 0
    %169 = vmatpush1.bf16.msra.mxu0 %v156
    %170 = vmatprep.subr.bf16.mxu0 0
    %171 = vmatpush1.bf16.msra.mxu0 %v157
    %172 = vmatprep.subr.bf16.mxu0 0
    %173 = vmatpush1.bf16.msra.mxu0 %v158
    %174 = vmatprep.subr.bf16.mxu0 0
    %175 = vmatpush1.bf16.msra.mxu0 %v159
    %176 = vmatprep.subr.bf16.mxu0 0
    %177 = vmatpush1.bf16.msra.mxu0 0
    %178 = vmatprep.subr.bf16.mxu0 0
    %179 = vmatpush1.bf16.msra.mxu0 0
    %180 = vmatprep.subr.bf16.mxu0 0
    %181 = vmatpush1.bf16.msra.mxu0 0
    %182 = vmatprep.subr.bf16.mxu0 0
    %183 = vmatpush1.bf16.msra.mxu0 0
    %184 = vmatprep.subr.bf16.mxu0 0
    %185 = vmatpush1.bf16.msra.mxu0 0
    %186 = vmatprep.subr.bf16.mxu0 0
    %187 = vmatpush1.bf16.msra.mxu0 0
    %188 = vmatprep.subr.bf16.mxu0 0
    %189 = vmatpush1.bf16.msra.mxu0 0
    %190 = vmatprep.subr.bf16.mxu0 0
    %191 = vmatpush1.bf16.msra.mxu0 0
    %192 = vmatprep.mubr.bf16.mxu0 0
    %193 = vmatmul.mubr.bf16.gmra.mrb[0].mxu0 %v135
    %v194 = vpop.f32.mrb[0].mxu0
    %v195 = vadd.f32 0.0, %v194
    %v196 = vpop.f32.mrb[0].mxu0
    %v197 = vpop.f32.mrb[0].mxu0
    %v198 = vpop.f32.mrb[0].mxu0
    %199 = vdwg.mxu0
    %v200 = vld [vmem:[%s4] sm:$0x1]
    %v202 = vlaneseq
    %v203 = vshrl.u32 %v202, 7
    %v204 = vsub.s32 0, %v203
    %v205 = vrot.slane %v200, %v204
    %v207 = vadd.f32 %v195, %v205
    %vm208 = vcmask 58368
    %209 = vst.msk [vmem:[#allocation8] sm:$0x3] %vm208, %v207
    // Predicated region
    $region34: #{tpu_custom_call.1} parent=1 // pred_check
      _
    $region35: #{tpu_custom_call.1} parent=1 // pred_check_branch
      %211 = sbr.rel (0) target = $region37
    $region36: #{tpu_custom_call.1} parent=1 // pred_region
      %s213 = ssub.s32 32, 32
      %214 = vsyncadd [#allocation4], %s213
      %s216 = sshll.u32 [#allocation8], 4
      %s217 = int_to_ptr.vmem [resolvable:$true] %s216
      %219 = dma.vmem_to_hbm [thread:$0]  %s217, 32, %s5, [#allocation4]
    $region37: #{tpu_custom_call.1} parent=1 // pred_fallthru
      _
    // Predicated region
    $region38: #{tpu_custom_call.1} parent=1 // pred_check
      _
    $region39: #{tpu_custom_call.1} parent=1 // pred_check_branch
      %221 = sbr.rel (0) target = $region41
    $region40: #{tpu_custom_call.1} parent=1 // pred_region
      %222 = dma.done [#allocation4], 32
    $region41: #{tpu_custom_call.1} parent=1 // pred_fallthru
      _
    %223 = vsyncpa [#allocation3], 1
    %224 = vsyncpa [#allocation6], 1
    %225 = vsyncpa [#allocation4], 1

</llo_original>
